<compile_context>
chip_gen: v7x
topology: tpu7x:2x2x1
jax: 0.10.0
libtpu: 0.0.40
codegen_flags: <defaults>
</compile_context>

<pallas_src>
import functools

import jax
import jax.numpy as jnp
from jax.experimental import pallas as pl
from jax.experimental.pallas import tpu as pltpu

BF16 = jnp.bfloat16


# ----------------------------------------------------------------------------
# Tiling helper: largest tile <= 2048 that divides M (multiple of 128 when
# tiled), keeping >= 2 grid steps for the big maps (v7x megacore).
# ----------------------------------------------------------------------------
def _pick_tm(M, max_tm=2048):
    if M <= 1024:
        return M
    for tm in (max_tm, 1024, 512, 256, 128):
        if M % tm == 0:
            return tm
    return M  # fallback: single tile


# ----------------------------------------------------------------------------
# Kernel 1: channel-mixing matmul (1x1 conv / transposed-conv core).
#   out(Cout, TM) = W(Cout, Cin) @ x(Cin, TM) + b  [lane-dense output]
# ----------------------------------------------------------------------------
def _cmix_kernel(x_ref, w_ref, b_ref, o_ref, *, relu_out):
    y = jnp.dot(w_ref[...], x_ref[0], preferred_element_type=jnp.float32)
    y = y + b_ref[...]
    if relu_out:
        y = jnp.maximum(y, 0.0)
    o_ref[0] = y.astype(o_ref.dtype)


def conv1x1(x, w, b, *, relu_out=False, out_dtype=BF16):
    """x: (B, Cin, M) channels-first flat; w: (Cout, Cin); b: (Cout,)."""
    B, Cin, M = x.shape
    Cout = w.shape[0]
    TM = _pick_tm(M)
    kernel = functools.partial(_cmix_kernel, relu_out=relu_out)
    return pl.pallas_call(
        kernel,
        out_shape=jax.ShapeDtypeStruct((B, Cout, M), out_dtype),
        grid=(B, M // TM),
        in_specs=[
            pl.BlockSpec((1, Cin, TM), lambda b_, j: (b_, 0, j)),
            pl.BlockSpec((Cout, Cin), lambda b_, j: (0, 0)),
            pl.BlockSpec((Cout, 1), lambda b_, j: (0, 0)),
        ],
        out_specs=pl.BlockSpec((1, Cout, TM), lambda b_, j: (b_, 0, j)),
        compiler_params=pltpu.CompilerParams(
            dimension_semantics=("parallel", "parallel")),
    )(x.astype(BF16), w.astype(BF16), b.reshape(Cout, 1).astype(jnp.float32))


# ----------------------------------------------------------------------------
# Kernel 2: fused multi-source 1x1 projection (final head).
#   out = sum_i W_i @ x_i + b   -- no channel concat materialized in HBM.
# ----------------------------------------------------------------------------
def _multi_cmix_kernel(*refs, n_in):
    xs = refs[:n_in]
    ws = refs[n_in:2 * n_in]
    b_ref = refs[2 * n_in]
    o_ref = refs[2 * n_in + 1]
    acc = jnp.dot(ws[0][...], xs[0][0], preferred_element_type=jnp.float32)
    for i in range(1, n_in):
        acc = acc + jnp.dot(ws[i][...], xs[i][0],
                            preferred_element_type=jnp.float32)
    acc = acc + b_ref[...]
    o_ref[0] = acc.astype(o_ref.dtype)


def fused_conv1x1_multi(xs, ws, b, *, out_dtype=jnp.float32):
    n_in = len(xs)
    B, _, M = xs[0].shape
    Cout = ws[0].shape[0]
    TM = _pick_tm(M)
    in_specs = []
    for x in xs:
        Ci = x.shape[1]
        in_specs.append(pl.BlockSpec((1, Ci, TM), lambda b_, j: (b_, 0, j)))
    for w in ws:
        Ci = w.shape[1]
        in_specs.append(pl.BlockSpec((Cout, Ci), lambda b_, j: (0, 0)))
    in_specs.append(pl.BlockSpec((Cout, 1), lambda b_, j: (0, 0)))
    kernel = functools.partial(_multi_cmix_kernel, n_in=n_in)
    args = ([x.astype(BF16) for x in xs] + [w.astype(BF16) for w in ws]
            + [b.reshape(Cout, 1).astype(jnp.float32)])
    return pl.pallas_call(
        kernel,
        out_shape=jax.ShapeDtypeStruct((B, Cout, M), out_dtype),
        grid=(B, M // TM),
        in_specs=in_specs,
        out_specs=pl.BlockSpec((1, Cout, TM), lambda b_, j: (b_, 0, j)),
        compiler_params=pltpu.CompilerParams(
            dimension_semantics=("parallel", "parallel")),
    )(*args)


# ----------------------------------------------------------------------------
# Kernel 3: 3x3 conv (padding=1) -- 9 taps accumulated in-kernel over static
# shifted slices of the VMEM-resident padded image (no im2col in HBM).
# Output is produced in "padded-width" flat form (Cout, H*(W+2)).
# ----------------------------------------------------------------------------
def _conv3x3_kernel(xp_ref, w_ref, b_ref, o_ref, *, Wc, Mo, relu_in, relu_out):
    x = xp_ref[0]                                    # (Cin, Mp) bf16
    if relu_in:
        x = jnp.maximum(x, 0)
    acc = None
    for di in range(3):
        for dj in range(3):
            off = di * Wc + dj
            part = jnp.dot(w_ref[di * 3 + dj], x[:, off:off + Mo],
                           preferred_element_type=jnp.float32)
            acc = part if acc is None else acc + part
    acc = acc + b_ref[...]
    if relu_out:
        acc = jnp.maximum(acc, 0.0)
    o_ref[0] = acc.astype(o_ref.dtype)


def conv3x3(x, w, b, *, stride=1, relu_in=False, relu_out=False, out_dtype=BF16):
    """x: (B, Cin, H, W); w: (9, Cout, Cin) tap-major; b: (Cout,). pad=1."""
    B, Cin, H, W = x.shape
    Cout = w.shape[1]
    Wc = W + 2
    Mo = H * Wc
    Mp = (H + 3) * Wc
    xp = jnp.pad(x.astype(BF16), ((0, 0), (0, 0), (1, 2), (1, 1)))
    xp = xp.reshape(B, Cin, Mp)
    kernel = functools.partial(_conv3x3_kernel, Wc=Wc, Mo=Mo,
                               relu_in=relu_in, relu_out=relu_out)
    y = pl.pallas_call(
        kernel,
        out_shape=jax.ShapeDtypeStruct((B, Cout, Mo), out_dtype),
        grid=(B,),
        in_specs=[
            pl.BlockSpec((1, Cin, Mp), lambda b_: (b_, 0, 0)),
            pl.BlockSpec((9, Cout, Cin), lambda b_: (0, 0, 0)),
            pl.BlockSpec((Cout, 1), lambda b_: (0, 0)),
        ],
        out_specs=pl.BlockSpec((1, Cout, Mo), lambda b_: (b_, 0, 0)),
        compiler_params=pltpu.CompilerParams(dimension_semantics=("parallel",)),
    )(xp, w.astype(BF16), b.reshape(Cout, 1).astype(jnp.float32))
    y = y.reshape(B, Cout, H, Wc)[:, :, :, :W]
    if stride == 2:
        y = y[:, :, ::2, ::2]
    # TODO(synk): for very large images, add halo-tiled row-group grids instead
    # of a single per-batch block.
    return y


# ----------------------------------------------------------------------------
# Kernel 4: fused ResidualConvUnit:  x + conv2(relu(conv1(relu(x)))).
# Both 3x3 convs, both ReLUs, the bias adds and the residual add happen in one
# kernel; the intermediate activation never touches HBM.
# ----------------------------------------------------------------------------
def _rcu_kernel(xp_ref, w1_ref, b1_ref, w2_ref, b2_ref, m_ref, o_ref, *,
                Wc, MpC, Mo, res_off):
    x = xp_ref[0]                                    # (C, Mp1) bf16 (pre-relu)
    xr = jnp.maximum(x, 0)                           # relu(x); pad zeros stay 0
    acc1 = None                                      # conv1 over (H+3, Wc) canvas
    for di in range(3):
        for dj in range(3):
            off = di * Wc + dj
            part = jnp.dot(w1_ref[di * 3 + dj], xr[:, off:off + MpC],
                           preferred_element_type=jnp.float32)
            acc1 = part if acc1 is None else acc1 + part
    c1 = jnp.maximum(acc1 + b1_ref[...], 0.0) * m_ref[...]   # relu + zero ring
    c1 = c1.astype(x.dtype)
    acc2 = None                                      # conv2 over (Cout, H*Wc)
    for di in range(3):
        for dj in range(3):
            off = di * Wc + dj
            part = jnp.dot(w2_ref[di * 3 + dj], c1[:, off:off + Mo],
                           preferred_element_type=jnp.float32)
            acc2 = part if acc2 is None else acc2 + part
    out = acc2 + b2_ref[...] + x[:, res_off:res_off + Mo].astype(jnp.float32)
    o_ref[0] = out.astype(o_ref.dtype)


def rcu_fused(x, p, *, out_dtype=BF16):
    """ResidualConvUnit (C == Cin == Cout).  x: (B, C, H, W)."""
    B, C, H, W = x.shape
    Wc = W + 2
    MpC = (H + 3) * Wc
    Mo = H * Wc
    Mp1 = (H + 6) * Wc
    xp = jnp.pad(x.astype(BF16), ((0, 0), (0, 0), (2, 4), (2, 0)))
    xp = xp.reshape(B, C, Mp1)
    row = jnp.arange(MpC) // Wc
    col = jnp.arange(MpC) % Wc
    mask = ((row >= 1) & (row <= H) & (col >= 1) & (col <= W))
    mask = mask.astype(jnp.float32).reshape(1, MpC)
    kernel = functools.partial(_rcu_kernel, Wc=Wc, MpC=MpC, Mo=Mo,
                               res_off=2 * Wc + 2)
    y = pl.pallas_call(
        kernel,
        out_shape=jax.ShapeDtypeStruct((B, C, Mo), out_dtype),
        grid=(B,),
        in_specs=[
            pl.BlockSpec((1, C, Mp1), lambda b_: (b_, 0, 0)),
            pl.BlockSpec((9, C, C), lambda b_: (0, 0, 0)),
            pl.BlockSpec((C, 1), lambda b_: (0, 0)),
            pl.BlockSpec((9, C, C), lambda b_: (0, 0, 0)),
            pl.BlockSpec((C, 1), lambda b_: (0, 0)),
            pl.BlockSpec((1, MpC), lambda b_: (0, 0)),
        ],
        out_specs=pl.BlockSpec((1, C, Mo), lambda b_: (b_, 0, 0)),
        compiler_params=pltpu.CompilerParams(dimension_semantics=("parallel",)),
    )(xp, p["w1"].astype(BF16), p["b1"].reshape(C, 1).astype(jnp.float32),
      p["w2"].astype(BF16), p["b2"].reshape(C, 1).astype(jnp.float32), mask)
    return y.reshape(B, C, H, Wc)[:, :, :, :W]


# ----------------------------------------------------------------------------
# Kernel 5: bilinear x2 upsample (align_corners=True) as separable
# interpolation-matrix matmuls on the MXU (no gathers).
# ----------------------------------------------------------------------------
def _up2_kernel(x_ref, rh_ref, rw_ref, o_ref, *, tc):
    rh = rh_ref[...]
    rw = rw_ref[...]
    for t in range(tc):
        slab = x_ref[t].astype(jnp.float32)                       # (H, W)
        tmp = jnp.dot(rh, slab, preferred_element_type=jnp.float32)   # (2H, W)
        o_ref[t] = jnp.dot(tmp, rw,
                           preferred_element_type=jnp.float32).astype(o_ref.dtype)


def _interp_matrix(n_in, n_out):
    if n_in == 1:
        return jnp.ones((n_out, 1), jnp.float32)
    src = jnp.arange(n_out, dtype=jnp.float32) * (n_in - 1) / (n_out - 1)
    i0 = jnp.floor(src).astype(jnp.int32)
    i1 = jnp.minimum(i0 + 1, n_in - 1)
    w = src - i0.astype(jnp.float32)
    rows = jnp.arange(n_out)
    m = jnp.zeros((n_out, n_in), jnp.float32)
    m = m.at[rows, i0].add(1.0 - w)
    m = m.at[rows, i1].add(w)
    return m


def up2_bilinear(x, *, out_dtype=BF16):
    """x: (B, C, H, W) -> (B, C, 2H, 2W), align_corners=True."""
    B, C, H, W = x.shape
    rh = _interp_matrix(H, 2 * H)          # (2H, H)
    rw = _interp_matrix(W, 2 * W).T        # (W, 2W)
    BC = B * C
    tc = 1
    for t in (8, 4, 2, 1):
        if BC % t == 0:
            tc = t
            break
    xr = x.reshape(BC, H, W)
    kernel = functools.partial(_up2_kernel, tc=tc)
    y = pl.pallas_call(
        kernel,
        out_shape=jax.ShapeDtypeStruct((BC, 2 * H, 2 * W), out_dtype),
        grid=(BC // tc,),
        in_specs=[
            pl.BlockSpec((tc, H, W), lambda i: (i, 0, 0)),
            pl.BlockSpec((2 * H, H), lambda i: (0, 0)),
            pl.BlockSpec((W, 2 * W), lambda i: (0, 0)),
        ],
        out_specs=pl.BlockSpec((tc, 2 * H, 2 * W), lambda i: (i, 0, 0)),
        compiler_params=pltpu.CompilerParams(dimension_semantics=("parallel",)),
    )(xr, rh, rw)
    return y.reshape(B, C, 2 * H, 2 * W)


# ----------------------------------------------------------------------------
# Transposed conv (kernel=s, stride=s): channel-mixing matmul + depth-to-space.
# TODO(synk): real PyTorch ConvTranspose2d weights (Cin, Cout, kH, kW) must be
# permuted to this (s*s*Cout, Cin) tap-major layout before use.
# ----------------------------------------------------------------------------
def deconv_s(x, w, b, s):
    B, Cin, H, W = x.shape
    Cout = w.shape[0] // (s * s)
    bias_full = jnp.tile(b, s * s)                        # chan = (di*s+dj)*Cout+co
    y = conv1x1(x.reshape(B, Cin, H * W), w, bias_full)   # (B, s*s*Cout, H*W)
    y = y.reshape(B, s, s, Cout, H, W)
    y = y.transpose(0, 3, 4, 1, 5, 2)                     # (B, Cout, H, s, W, s)
    return y.reshape(B, Cout, H * s, W * s)


# ----------------------------------------------------------------------------
# DPT output adapter (DPTOutputAdapter_fix equivalent) forward, channels-first.
# ----------------------------------------------------------------------------
def dpt_forward(params, tokens_list, depths, imgs, image_size, conf):
    H_img, W_img = image_size
    P = params["patch_size"]
    B = tokens_list[0].shape[0]
    Hp, Wp = H_img // P, W_img // P
    F = params["feature_dim"]

    # 1) hook tokens -> act_postprocess (proj 1x1 + spatial resize).
    layers = []
    for idx, hook in enumerate(params["hooks"]):
        t = jnp.swapaxes(tokens_list[hook], 1, 2)          # (B, D, N)
        pp = params["act_postprocess"][idx]
        t = conv1x1(t, pp["proj_w"], pp["proj_b"])         # (B, L, N)
        t = t.reshape(B, -1, Hp, Wp)
        if pp["mode"] == "up4":
            t = deconv_s(t, pp["rs_w"], pp["rs_b"], 4)
        elif pp["mode"] == "up2":
            t = deconv_s(t, pp["rs_w"], pp["rs_b"], 2)
        elif pp["mode"] == "down2":
            t = conv3x3(t, pp["rs_w"], pp["rs_b"], stride=2)
        layers.append(t)

    # 2) scratch.layer_rn: 3x3 conv (no bias) to the common feature dim.
    zero_b = jnp.zeros((F,), jnp.float32)
    layers = [conv3x3(l, params["layer_rn"][i]["w"], zero_b)
              for i, l in enumerate(layers)]

    # 3) RefineNet fusion blocks (each RCU is one fused kernel).
    def fusion(p, x, skip=None):
        out = x
        if skip is not None:
            out = out + rcu_fused(skip, p["rcu1"])
        out = rcu_fused(out, p["rcu2"])
        # out_conv (1x1) commutes with the bilinear x2 upsample; apply it first
        # on the smaller map (4x less matmul work), then upsample.
        B_, C_, h_, w_ = out.shape
        out = conv1x1(out.reshape(B_, C_, h_ * w_), p["out_w"], p["out_b"])
        out = out.reshape(B_, -1, h_, w_)
        return up2_bilinear(out)

    fb = params["fusion"]
    path4 = fusion(fb[3], layers[3])
    path4 = path4[:, :, :layers[2].shape[2], :layers[2].shape[3]]
    path3 = fusion(fb[2], path4, layers[2])
    path2 = fusion(fb[1], path3, layers[1])
    path1 = fusion(fb[0], path2, layers[0])

    # 4) head: conv3x3 -> x2 bilinear -> conv3x3 + ReLU -> fused final 1x1.
    hp = params["head"]
    x = conv3x3(path1, hp["w1"], hp["b1"])
    x = up2_bilinear(x)
    x = conv3x3(x, hp["w2"], hp["b2"], relu_out=True)
    # TODO(synk): the exact way DPTOutputAdapter_fix conditions on (depths,
    # imgs, conf) is not in the provided source; approximated as channel-wise
    # conditioning before the final 1x1 (here: sum of per-source matmuls).
    Bx, Cx, Hx, Wx = x.shape
    M = Hx * Wx
    xs = [x.reshape(Bx, Cx, M), imgs.reshape(Bx, -1, M),
          depths.reshape(Bx, -1, M)]
    ws = [hp["w3_x"], hp["w3_img"], hp["w3_depth"]]
    if conf is not None:
        xs.append(conf.reshape(Bx, -1, M))
        ws.append(hp["w3_conf"])
    out = fused_conv1x1_multi(xs, ws, hp["b3"], out_dtype=jnp.float32)
    out = out.reshape(Bx, -1, Hx, Wx)

    # TODO(synk): intermediate-feature selection approximated as path1.
    interm_feats = path1.astype(jnp.float32)
    return out, interm_feats


# ----------------------------------------------------------------------------
# Module wrapper mirroring PixelwiseTaskWithDPT.forward (NCHW in, NCHW out).
# ----------------------------------------------------------------------------
class PixelwiseTaskWithDPT:
    def __init__(self, params, postprocess=None, depth_mode=None, conf_mode=None):
        self.params = params
        self.postprocess = postprocess
        self.depth_mode = depth_mode
        self.conf_mode = conf_mode

    def forward(self, x, depths, imgs, img_info, conf=None):
        # TODO(synk): img_info must be static Python ints (breaks if traced).
        out, interm_feats = dpt_forward(
            self.params, x, depths, imgs,
            (int(img_info[0]), int(img_info[1])), conf)
        if self.postprocess is not None:
            out = self.postprocess(out, self.depth_mode, self.conf_mode)
        return out, interm_feats


# ----------------------------------------------------------------------------
# Deterministic parameter init (shapes implied by the DPT adapter __init__).
# Conv weights stored as (Cout, Cin) / (9 taps, Cout, Cin); transposed convs as
# (s*s*Cout, Cin).  TODO(synk): permute real PyTorch checkpoints accordingly.
# ----------------------------------------------------------------------------
def init_params(key, *, dim_tokens=32, patch_size=16, layer_dims=(16, 16, 32, 32),
                feature_dim=32, num_channels=4, hooks=(0, 1, 2, 3), with_conf=True):
    keys = iter(jax.random.split(key, 128))

    def nrm(shape, scale=0.05):
        return scale * jax.random.normal(next(keys), shape, dtype=jnp.float32)

    D, F = dim_tokens, feature_dim
    modes = ("up4", "up2", "id", "down2")
    act_pp = []
    for i, L in enumerate(layer_dims):
        p = {"mode": modes[i], "proj_w": nrm((L, D)), "proj_b": nrm((L,))}
        if modes[i] == "up4":
            p["rs_w"], p["rs_b"] = nrm((16 * L, L)), nrm((L,))
        elif modes[i] == "up2":
            p["rs_w"], p["rs_b"] = nrm((4 * L, L)), nrm((L,))
        elif modes[i] == "down2":
            p["rs_w"], p["rs_b"] = nrm((9, L, L)), nrm((L,))
        act_pp.append(p)

    layer_rn = [{"w": nrm((9, F, L))} for L in layer_dims]

    def rcu_params():
        return {"w1": nrm((9, F, F)), "b1": nrm((F,)),
                "w2": nrm((9, F, F)), "b2": nrm((F,))}

    fusion = [{"rcu1": rcu_params(), "rcu2": rcu_params(),
               "out_w": nrm((F, F)), "out_b": nrm((F,))} for _ in range(4)]

    head = {"w1": nrm((9, F // 2, F)), "b1": nrm((F // 2,)),
            "w2": nrm((9, 32, F // 2)), "b2": nrm((32,)),
            "w3_x": nrm((num_channels, 32)),
            "w3_img": nrm((num_channels, 3)),
            "w3_depth": nrm((num_channels, 1)),
            "b3": nrm((num_channels,))}
    if with_conf:
        head["w3_conf"] = nrm((num_channels, 1))

    return {"patch_size": patch_size, "hooks": tuple(hooks), "feature_dim": F,
            "act_postprocess": act_pp, "layer_rn": layer_rn,
            "fusion": fusion, "head": head}


if __name__ == "__main__":
    B, H, W = 2, 64, 64
    P, D = 16, 32
    Hp, Wp = H // P, W // P
    num_channels = 4

    key = jax.random.PRNGKey(0)
    kp, kx, kd, ki, kc = jax.random.split(key, 5)

    params = init_params(kp, dim_tokens=D, patch_size=P,
                         layer_dims=(16, 16, 32, 32), feature_dim=32,
                         num_channels=num_channels, hooks=(0, 1, 2, 3),
                         with_conf=True)

    # x: list of ViT hook token maps, each (B, N_tokens, dim_tokens)
    tokens = [jax.random.normal(k, (B, Hp * Wp, D), jnp.float32)
              for k in jax.random.split(kx, 4)]
    depths = jax.random.uniform(kd, (B, 1, H, W), jnp.float32)   # NCHW
    imgs = jax.random.uniform(ki, (B, 3, H, W), jnp.float32)     # NCHW
    conf = jax.random.uniform(kc, (B, 1, H, W), jnp.float32)     # NCHW
    img_info = (H, W)

    module = PixelwiseTaskWithDPT(params, postprocess=None)
    out, interm_feats = module.forward(tokens, depths, imgs, img_info, conf=conf)
    out = jax.block_until_ready(out)
    interm_feats = jax.block_until_ready(interm_feats)

    assert out.shape == (B, num_channels, H, W), out.shape
    assert interm_feats.shape == (B, 32, H // 2, W // 2), interm_feats.shape
    assert bool(jnp.all(jnp.isfinite(out))) and bool(jnp.all(jnp.isfinite(interm_feats)))
    print("KERNEL_OK")
</pallas_src>

<mosaic_0001>
module attributes {stable_mosaic.version = 11 : i64} {
  func.func @_cmix_kernel(%arg0: i32, %arg1: i32, %arg2: memref<1x32x16xbf16, #tpu.memory_space<vmem>>, %arg3: memref<16x32xbf16, #tpu.memory_space<vmem>>, %arg4: memref<16x1xf32, #tpu.memory_space<vmem>>, %arg5: memref<1x16x16xbf16, #tpu.memory_space<vmem>>) attributes {dimension_semantics = [#tpu.dimension_semantics<parallel>, #tpu.dimension_semantics<parallel>], iteration_bounds = array<i64: 2, 1>, scalar_prefetch = 0 : i64, scratch_operands = 0 : i64, tpu.core_type = #tpu.core_type<tc>, window_params = [{transform_indices = @transform_0, window_bounds = array<i64: 1, 32, 16>}, {pipeline_mode = #tpu.pipeline_mode<synchronous>, transform_indices = @transform_1, window_bounds = array<i64: 16, 32>}, {pipeline_mode = #tpu.pipeline_mode<synchronous>, transform_indices = @transform_2, window_bounds = array<i64: 16, 1>}, {transform_indices = @transform_3, window_bounds = array<i64: 1, 16, 16>}]} {
    %c0 = arith.constant 0 : index
    %c0_0 = arith.constant 0 : index
    %0 = vector.load %arg3[%c0, %c0_0] : memref<16x32xbf16, #tpu.memory_space<vmem>>, vector<16x32xbf16>
    %c0_1 = arith.constant 0 : index
    %c0_2 = arith.constant 0 : index
    %c0_3 = arith.constant 0 : index
    %1 = vector.load %arg2[%c0_1, %c0_2, %c0_3] : memref<1x32x16xbf16, #tpu.memory_space<vmem>>, vector<1x32x16xbf16>
    %2 = vector.shape_cast %1 : vector<1x32x16xbf16> to vector<32x16xbf16>
    %cst = arith.constant dense<0.000000e+00> : vector<16x16xf32>
    %3 = tpu.matmul %0, %2, %cst {dimension_numbers = #tpu.dot_dimension_numbers<[1], [0], [0], [1], [0, 0, 1, 1], [], []>} : vector<16x32xbf16>, vector<32x16xbf16>, vector<16x16xf32> -> vector<16x16xf32>
    %c0_4 = arith.constant 0 : index
    %c0_5 = arith.constant 0 : index
    %4 = vector.load %arg4[%c0_4, %c0_5] : memref<16x1xf32, #tpu.memory_space<vmem>>, vector<16x1xf32>
    %5 = vector.broadcast %4 : vector<16x1xf32> to vector<16x16xf32>
    %6 = arith.addf %3, %5 : vector<16x16xf32>
    %7 = arith.truncf %6 : vector<16x16xf32> to vector<16x16xbf16>
    %c0_6 = arith.constant 0 : index
    %c0_7 = arith.constant 0 : index
    %c0_8 = arith.constant 0 : index
    %8 = vector.load %arg5[%c0_6, %c0_7, %c0_8] : memref<1x16x16xbf16, #tpu.memory_space<vmem>>, vector<1x16x16xbf16>
    %9 = vector.shape_cast %8 : vector<1x16x16xbf16> to vector<16x16xbf16>
    %10 = vector.shape_cast %7 : vector<16x16xbf16> to vector<1x16x16xbf16>
    tpu.vector_store %arg5[%c0_6, %c0_7, %c0_8], %10 {strides = array<i32>} : memref<1x16x16xbf16, #tpu.memory_space<vmem>>, vector<1x16x16xbf16>,
    return
  }
  func.func @transform_0(%arg0: i32, %arg1: i32) -> (i32, i32, i32) {
    %c0_i32 = arith.constant 0 : i32
    %c0_i32_0 = arith.constant 0 : i32
    return %arg0, %c0_i32, %arg1 : i32, i32, i32
  }
  func.func @transform_1(%arg0: i32, %arg1: i32) -> (i32, i32) {
    %c0_i32 = arith.constant 0 : i32
    %c0_i32_0 = arith.constant 0 : i32
    %c0_i32_1 = arith.constant 0 : i32
    return %c0_i32, %c0_i32_0 : i32, i32
  }
  func.func @transform_2(%arg0: i32, %arg1: i32) -> (i32, i32) {
    %c0_i32 = arith.constant 0 : i32
    %c0_i32_0 = arith.constant 0 : i32
    %c0_i32_1 = arith.constant 0 : i32
    return %c0_i32, %c0_i32_0 : i32, i32
  }
  func.func @transform_3(%arg0: i32, %arg1: i32) -> (i32, i32, i32) {
    %c0_i32 = arith.constant 0 : i32
    %c0_i32_0 = arith.constant 0 : i32
    return %arg0, %c0_i32, %arg1 : i32, i32, i32
  }
}

</mosaic_0001>

<llo_original>
// kernel: tpu_custom_call.1
$region0: #{tpu_custom_call.1}
  #allocation0 [shape = 'u32[]', space=smem, size = 0x4, offset = 0x4, fixed_abs, tag = 'smem constant byte address 0x4 - core index']
  #allocation1 [shape = 'u32[144,128]{1,0:T(1,128)}', space=vmem, size = 0x12000, scoped, tag = 'internal scratch']
  %s0 = inlined_call_operand.vmem [shape: bf16[2,32,16], index: 0, kind: input, shape index: {}]
  %s1 = inlined_call_operand.vmem [shape: bf16[16,32], index: 1, kind: input, shape index: {}]
  %s2 = inlined_call_operand.vmem [shape: f32[16,1], index: 2, kind: input, shape index: {}]
  %s3 = inlined_call_operand.hbm [shape: bf16[2,16,16], index: 3, kind: output, shape index: {}]
  %s4 = sld [smem:[#allocation0]]
  $region45: #{tpu_custom_call.1} parent=0
    _
  %s6 = ssub.s32 1, %s4
  %s7 = scalar_select 0, %s6, %s4
  $region1: #{tpu_custom_call.1} parent=0
    #allocation2 [shape = 'u8[8192]{0}', space=vmem, size = 0x2000, scoped, tag = 'output window, operand 0']
    #allocation3 [shape = 's32[2]{0}', space=sflag, size = 0x8, scoped, tag = 'scoped memory for tpu_custom_call.1']
    %8 = vsyncpa [#allocation3], 0
    %s9 = scalar_lea.sflag [#allocation3], 1
    %10 = vsyncpa %s9, 0
    loop: start=0, step=1, limit=4
    $region2: #{tpu_custom_call.1} parent=1 // loop_pre_header
      _
    $region3: #{tpu_custom_call.1} parent=1 // loop_header
      %s12 = sphi 0, %s16
      %p13 = scmp.ge.s32.totalorder %s12, 4
      %s19 = sphi 0, %s31
      %s20 = sphi 0, %s27
      %s21 = sphi 0, %s19
      %s22 = sphi 0, %s20
      %s23 = sphi 0, %s21
      %s24 = sphi 0, %s22
      %s36 = sphi 0, %s38
      %s39 = sphi 0, %s36
      %s40 = sphi 0, %s39
      %s56 = sphi 0, %s40
      %s60 = sphi 0, %s60
      %s62 = sphi 0, %s60
      %s63 = sphi 0, %s62
      %s77 = sphi 0, %s63
      %s81 = sphi 0, %s81
      %s83 = sphi 0, %s81
      %s84 = sphi 0, %s83
      %s98 = sphi 0, %s84
      %s106 = sphi 0, %s108
      %s109 = sphi 0, %s106
      %s110 = sphi 0, %s109
      %s126 = sphi 0, %s110
    $region4: #{tpu_custom_call.1} parent=1 // loop_header_branch
      %15 = sbr.rel (%p13) target = $region8
    $region5: #{tpu_custom_call.1} parent=1 // loop_body
      %s17 = ssub.s32 %s12, 1
      %s18 = ssub.s32 %s12, 2
      %s25 = sadd.s32 1, %s20
      %p26 = scmp.ge.s32.totalorder %s25, 1
      %s27 = scalar_select %p26, 0, %s25
      %s28 = sadd.s32 1, %s19
      %s29 = scalar_select %p26, %s28, %s19
      %p30 = scmp.ge.s32.totalorder %s29, 2
      %s31 = scalar_select %p30, 0, %s29
      %s32 = ssub.s32 %s19, %s31
      %s33 = ssub.s32 %s20, %s27
      %s34 = sor.u32 %s32, %s33
      %p35 = scmp.eq.s32.totalorder %s34, 0
      %s37 = sadd.s32 %s36, 1
      %s38 = scalar_select %p35, %s36, %s37
      %p41 = pneg %p35
      %p42 = scmp.eq.s32.totalorder %s12, 1
      %p43 = por %p41, %p42
      %p44 = scmp.ne.s32.totalorder %s36, %s39
      %p45 = scmp.eq.s32.totalorder %s12, 0
      %p46 = por %p44, %p45
      %p47 = scmp.ne.s32.totalorder %s36, %s39
      %p48 = scmp.eq.s32.totalorder %s17, 1
      %p49 = por %p47, %p48
      %p50 = scmp.ne.s32.totalorder %s39, %s40
      %p51 = scmp.eq.s32.totalorder %s17, 0
      %p52 = por %p50, %p51
      %p53 = scmp.ne.s32.totalorder %s39, %s40
      %p54 = scmp.eq.s32.totalorder %s18, 1
      %p55 = por %p53, %p54
      %p57 = scmp.ne.s32.totalorder %s40, %s56
      %p58 = scmp.eq.s32.totalorder %s18, 0
      %p59 = por %p57, %p58
      %s61 = sadd.s32 %s60, 1
      %p64 = scmp.eq.s32.totalorder %s12, 1
      %p65 = scmp.ne.s32.totalorder %s60, %s62
      %p66 = scmp.eq.s32.totalorder %s12, 0
      %p67 = por %p65, %p66
      %p68 = scmp.ne.s32.totalorder %s60, %s62
      %p69 = scmp.eq.s32.totalorder %s17, 1
      %p70 = por %p68, %p69
      %p71 = scmp.ne.s32.totalorder %s62, %s63
      %p72 = scmp.eq.s32.totalorder %s17, 0
      %p73 = por %p71, %p72
      %p74 = scmp.ne.s32.totalorder %s62, %s63
      %p75 = scmp.eq.s32.totalorder %s18, 1
      %p76 = por %p74, %p75
      %p78 = scmp.ne.s32.totalorder %s63, %s77
      %p79 = scmp.eq.s32.totalorder %s18, 0
      %p80 = por %p78, %p79
      %s82 = sadd.s32 %s81, 1
      %p85 = scmp.eq.s32.totalorder %s12, 1
      %p86 = scmp.ne.s32.totalorder %s81, %s83
      %p87 = scmp.eq.s32.totalorder %s12, 0
      %p88 = por %p86, %p87
      %p89 = scmp.ne.s32.totalorder %s81, %s83
      %p90 = scmp.eq.s32.totalorder %s17, 1
      %p91 = por %p89, %p90
      %p92 = scmp.ne.s32.totalorder %s83, %s84
      %p93 = scmp.eq.s32.totalorder %s17, 0
      %p94 = por %p92, %p93
      %p95 = scmp.ne.s32.totalorder %s83, %s84
      %p96 = scmp.eq.s32.totalorder %s18, 1
      %p97 = por %p95, %p96
      %p99 = scmp.ne.s32.totalorder %s84, %s98
      %p100 = scmp.eq.s32.totalorder %s18, 0
      %p101 = por %p99, %p100
      %s102 = ssub.s32 %s19, %s31
      %s103 = ssub.s32 %s20, %s27
      %s104 = sor.u32 %s102, %s103
      %p105 = scmp.eq.s32.totalorder %s104, 0
      %s107 = sadd.s32 %s106, 1
      %s108 = scalar_select %p105, %s106, %s107
      %p111 = pneg %p105
      %p112 = scmp.eq.s32.totalorder %s12, 1
      %p113 = por %p111, %p112
      %p114 = scmp.ne.s32.totalorder %s106, %s109
      %p115 = scmp.eq.s32.totalorder %s12, 0
      %p116 = por %p114, %p115
      %p117 = scmp.ne.s32.totalorder %s106, %s109
      %p118 = scmp.eq.s32.totalorder %s17, 1
      %p119 = por %p117, %p118
      %p120 = scmp.ne.s32.totalorder %s109, %s110
      %p121 = scmp.eq.s32.totalorder %s17, 0
      %p122 = por %p120, %p121
      %p123 = scmp.ne.s32.totalorder %s109, %s110
      %p124 = scmp.eq.s32.totalorder %s18, 1
      %p125 = por %p123, %p124
      %p127 = scmp.ne.s32.totalorder %s110, %s126
      %p128 = scmp.eq.s32.totalorder %s18, 0
      %p129 = por %p127, %p128
      %p130 = scmp.le.s32.totalorder 1, %s12
      %p131 = scmp.lt.s32.totalorder %s12, 3
      %p132 = pnand %p130, %p131
      %p133 = pneg %p132
      // Predicated region
      $region9: #{tpu_custom_call.1} parent=5 // pred_check
        _
      $region10: #{tpu_custom_call.1} parent=5 // pred_check_branch
        %135 = sbr.rel (%p132) target = $region12
      $region11: #{tpu_custom_call.1} parent=5 // pred_region
        %s136 = ssub.s32 %s12, 1
        // Predicated region
        $region13: #{tpu_custom_call.1} parent=11 // pred_check
          %p137 = pneg %p73
        $region14: #{tpu_custom_call.1} parent=11 // pred_check_branch
          %139 = sbr.rel (%p137) target = $region16
        $region15: #{tpu_custom_call.1} parent=11 // pred_region
          _
        $region16: #{tpu_custom_call.1} parent=11 // pred_fallthru
          _
        // Predicated region
        $region17: #{tpu_custom_call.1} parent=11 // pred_check
          %p140 = pneg %p94
        $region18: #{tpu_custom_call.1} parent=11 // pred_check_branch
          %142 = sbr.rel (%p140) target = $region20
        $region19: #{tpu_custom_call.1} parent=11 // pred_region
          _
        $region20: #{tpu_custom_call.1} parent=11 // pred_fallthru
          _
      $region12: #{tpu_custom_call.1} parent=5 // pred_fallthru
        _
      %p143 = scmp.lt.s32.totalorder %s12, 2
      // Predicated region
      $region21: #{tpu_custom_call.1} parent=5 // pred_check
        %p144 = pneg %p143
      $region22: #{tpu_custom_call.1} parent=5 // pred_check_branch
        %146 = sbr.rel (%p144) target = $region24
      $region23: #{tpu_custom_call.1} parent=5 // pred_region
        // Predicated region
        $region25: #{tpu_custom_call.1} parent=23 // pred_check
          %p147 = pneg %p46
        $region26: #{tpu_custom_call.1} parent=23 // pred_check_branch
          %149 = sbr.rel (%p147) target = $region28
        $region27: #{tpu_custom_call.1} parent=23 // pred_region
          %p150 = scmp.lt.s32.totalorder %s19, 1
          %s151 = scalar_select %p150, %s19, 1
          %p152 = scmp.lt.s32.totalorder %s20, 0
          %s153 = scalar_select %p152, %s20, 0
          %s154 = smul.addr %s151, 4
          %s155 = sadd.s32 %s153, %s154
          %s156 = smul.addr %s155, 4
          %s157 = scalar_lea.vmem %s0, %s156
        $region28: #{tpu_custom_call.1} parent=23 // pred_fallthru
          _
      $region24: #{tpu_custom_call.1} parent=5 // pred_fallthru
        _
      %p158 = scmp.le.s32.totalorder 1, %s12
      %p159 = scmp.lt.s32.totalorder %s12, 3
      %p160 = pnand %p158, %p159
      %p161 = pneg %p160
      // Predicated region
      $region29: #{tpu_custom_call.1} parent=5 // pred_check
        _
      $region30: #{tpu_custom_call.1} parent=5 // pred_check_branch
        %163 = sbr.rel (%p160) target = $region32
      $region31: #{tpu_custom_call.1} parent=5 // pred_region
        %s164 = ssub.s32 %s12, 1
        %p165 = scmp.lt.s32.totalorder %s21, 1
        %s166 = scalar_select %p165, %s21, 1
        %p167 = scmp.lt.s32.totalorder %s22, 0
        %s168 = scalar_select %p167, %s22, 0
        %s169 = smul.addr %s166, 4
        %s170 = sadd.s32 %s168, %s169
        %s171 = smul.addr %s170, 4
        %s172 = scalar_lea.vmem %s0, %s171
        %p173 = pneg %p52
        %p174 = pneg %p49
        %p175 = pneg %p73
        %p176 = pneg %p70
        %p177 = pneg %p94
        %p178 = pneg %p91
        %p179 = pneg %p122
        %p180 = pneg %p119
        %s181 = sand.u32 %s109, 1
        %s182 = scalar_lea.sflag [#allocation3], %s181
        %s183 = sand.u32 %s109, 1
        %s184 = smul.addr %s183, 8
        %s185 = scalar_lea.vmem [#allocation2], %s184
        %p186 = scmp.lt.s32.totalorder %s21, 1
        %s187 = scalar_select %p186, %s21, 1
        %p188 = scmp.lt.s32.totalorder %s22, 0
        %s189 = scalar_select %p188, %s22, 0
        %s190 = smul.addr %s187, 4
        %s191 = sadd.s32 %s189, %s190
        %s192 = smul.addr %s191, 4
        %s193 = scalar_lea.vmem %s0, %s192
        %v195 = vld [vmem:[%s1] sm:$0xf]
        %v196 = vld [vmem:[%s1 + $0x4] sm:$0xf]
        %v197 = vld [vmem:[%s193] sm:$0xf]
        %v198 = vld [vmem:[%s193 + $0x4] sm:$0xf]
        %v199 = vld [vmem:[%s193 + $0x8] sm:$0xf]
        %v200 = vld [vmem:[%s193 + $0xc] sm:$0xf]
        %v201 = vld [vmem:[%s2] sm:$0xff]
        %v202 = vld [vmem:[%s2 + $0x8] sm:$0xff]
        %204 = vset.pattern.permute.xlu0 0
        %205 = vperm.xlu0 %204, %v201
        %v206 = vpop.permute.xlu0 %205
        %209 = vset.pattern.permute.xlu0 0
        %210 = vperm.xlu0 %209, %v202
        %v211 = vpop.permute.xlu0 %210
        %v215 = vunpack.c.l.b16 %v195
        %v216 = vunpack.c.l.b16 %v196
        %v217 = vpack.c.b16 %v216, %v215
        %v222 = vunpack.c.l.b16 %v197
        %v223 = vunpack.c.l.b16 %v198
        %v224 = vunpack.c.l.b16 %v199
        %v225 = vunpack.c.l.b16 %v200
        %v226 = vpack.c.b16 %v223, %v222
        %v227 = vpack.c.b16 %v225, %v224
        %vm230 = vcmask 261120
        %v232 = vsel %vm230, %v217, 0
        %234 = vmatprep.subr.bf16.mxu0 0
        %235 = vmatpush1.bf16.msra.mxu0 %v226
        %236 = vmatprep.subr.bf16.mxu0 0
        %237 = vmatpush1.bf16.msra.mxu0 %v227
        %238 = vmatprep.subr.bf16.mxu0 0
        %239 = vmatpush1.bf16.msra.mxu0 0
        %240 = vmatprep.subr.bf16.mxu0 0
        %241 = vmatpush1.bf16.msra.mxu0 0
        %242 = vmatprep.subr.bf16.mxu0 0
        %243 = vmatpush1.bf16.msra.mxu0 0
        %244 = vmatprep.subr.bf16.mxu0 0
        %245 = vmatpush1.bf16.msra.mxu0 0
        %246 = vmatprep.subr.bf16.mxu0 0
        %247 = vmatpush1.bf16.msra.mxu0 0
        %248 = vmatprep.subr.bf16.mxu0 0
        %249 = vmatpush1.bf16.msra.mxu0 0
        %250 = vmatprep.subr.bf16.mxu0 0
        %251 = vmatpush1.bf16.msra.mxu0 0
        %252 = vmatprep.subr.bf16.mxu0 0
        %253 = vmatpush1.bf16.msra.mxu0 0
        %254 = vmatprep.subr.bf16.mxu0 0
        %255 = vmatpush1.bf16.msra.mxu0 0
        %256 = vmatprep.subr.bf16.mxu0 0
        %257 = vmatpush1.bf16.msra.mxu0 0
        %258 = vmatprep.subr.bf16.mxu0 0
        %259 = vmatpush1.bf16.msra.mxu0 0
        %260 = vmatprep.subr.bf16.mxu0 0
        %261 = vmatpush1.bf16.msra.mxu0 0
        %262 = vmatprep.subr.bf16.mxu0 0
        %263 = vmatpush1.bf16.msra.mxu0 0
        %264 = vmatprep.subr.bf16.mxu0 0
        %265 = vmatpush1.bf16.msra.mxu0 0
        %266 = vmatprep.mubr.bf16.mxu0 0
        %267 = vmatmul.mubr.bf16.gmra.mrb[0].mxu0 %v232
        %v268 = vpop.f32.mrb[0].mxu0
        %v269 = vadd.f32 %v206, %v268
        %v270 = vpop.f32.mrb[0].mxu0
        %v271 = vpop.f32.mrb[0].mxu0
        %v272 = vadd.f32 %v211, %v271
        %v273 = vpop.f32.mrb[0].mxu0
        %274 = vdwg.mxu0
        %v275 = vpack.c.bf16 %v272, %v269
        %v277 = vunpack.c.l.b16 %v275
        %v278 = vunpack.c.h.b16 %v275
        %v279 = vpack.c.b16 %v277, %v277
        %v280 = vpack.c.b16 %v278, %v278
        %vm283 = vcmask 125952
        %284 = vst.msk [vmem:[%s185] sm:$0xf] %vm283, %v279
        %285 = vst.msk [vmem:[%s185 + $0x4] sm:$0xf] %vm283, %v280
        %s286 = sand.u32 %s109, 1
        %s287 = scalar_lea.sflag [#allocation3], %s286
        %s288 = sand.u32 %s109, 1
        %s289 = smul.addr %s288, 8
        %s290 = scalar_lea.vmem [#allocation2], %s289
        // Predicated region
        $region33: #{tpu_custom_call.1} parent=31 // pred_check
          %p291 = pneg %p119
        $region34: #{tpu_custom_call.1} parent=31 // pred_check_branch
          %293 = sbr.rel (%p291) target = $region36
        $region35: #{tpu_custom_call.1} parent=31 // pred_region
          %s295 = ssub.s32 128, 128
          %296 = vsyncadd %s287, %s295
          %s297 = smul.addr %s21, 2
          %s298 = sadd.s32 %s22, %s297
          %s299 = smul.addr %s298, 64
          %s300 = scalar_lea.hbm %s3, %s299
          %s301 = sshll.u32 %s290, 4
          %s302 = int_to_ptr.vmem [resolvable:$true] %s301
          %307 = dma.vmem_to_hbm [thread:$0]  %s302, 128, %s300, %s287, 64, 64, 4
        $region36: #{tpu_custom_call.1} parent=31 // pred_fallthru
          _
      $region32: #{tpu_custom_call.1} parent=5 // pred_fallthru
        _
      %p308 = scmp.le.s32.totalorder 2, %s12
      // Predicated region
      $region37: #{tpu_custom_call.1} parent=5 // pred_check
        %p309 = pneg %p308
      $region38: #{tpu_custom_call.1} parent=5 // pred_check_branch
        %311 = sbr.rel (%p309) target = $region40
      $region39: #{tpu_custom_call.1} parent=5 // pred_region
        %s312 = ssub.s32 %s12, 2
        // Predicated region
        $region41: #{tpu_custom_call.1} parent=39 // pred_check
          %p313 = pneg %p125
        $region42: #{tpu_custom_call.1} parent=39 // pred_check_branch
          %315 = sbr.rel (%p313) target = $region44
        $region43: #{tpu_custom_call.1} parent=39 // pred_region
          %s316 = sand.u32 %s110, 1
          %s317 = scalar_lea.sflag [#allocation3], %s316
          %s318 = sand.u32 %s110, 1
          %s319 = smul.addr %s318, 8
          %s320 = scalar_lea.vmem [#allocation2], %s319
          %321 = dma.done %s317, 128
        $region44: #{tpu_custom_call.1} parent=39 // pred_fallthru
          _
      $region40: #{tpu_custom_call.1} parent=5 // pred_fallthru
        _
    $region6: #{tpu_custom_call.1} parent=1 // loop_footer
      %s16 = sadd.s32 1, %s12
    $region7: #{tpu_custom_call.1} parent=1 // loop_footer_branch
      %11 = sbr.rel target = $region3
    $region8: #{tpu_custom_call.1} parent=1 // loop_exit
      _
    %322 = vsyncpa [#allocation3], 1
    %s323 = scalar_lea.sflag [#allocation3], 1
    %324 = vsyncpa %s323, 1

</llo_original>
